<compile_context>
chip_gen: v6e
topology: v6e:2x2x1
jax: 0.10.0
libtpu: 0.0.40
codegen_flags: <defaults>
</compile_context>

<pallas_src>
import functools

import jax
import jax.numpy as jnp
from jax.experimental import pallas as pl
from jax.experimental.pallas import tpu as pltpu


def _round_up(x, m):
    return (x + m - 1) // m * m


def _cdiv(a, b):
    return -(-a // b)


def _mlp_kernel(x_ref, w1_ref, b1_ref, w2_ref, b2_ref, o_ref, acc_ref, *,
                approximate_gelu):
    # x_ref:   (tm, C_in_p)      token tile (native dtype)
    # w1_ref:  (C_in_p, tk_h)    fc1 weight slab
    # b1_ref:  (1, tk_h)         fc1 bias slab
    # w2_ref:  (tk_h, C_out_p)   fc2 weight slab
    # b2_ref:  (1, C_out_p)      fc2 bias (resident)
    # o_ref:   (tm, C_out_p)     output tile
    # acc_ref: (tm, C_out_p) f32 fc2 accumulator, persists across hidden slabs
    k = pl.program_id(1)

    @pl.when(k == 0)
    def _():
        acc_ref[...] = jnp.zeros_like(acc_ref)

    # fc1 slab on the MXU, f32 accumulation.
    h = jnp.dot(x_ref[...], w1_ref[...], preferred_element_type=jnp.float32)
    h = h + b1_ref[...].astype(jnp.float32)

    if approximate_gelu:
        # tanh form -> EUP slot; NOT bit-exact vs torch.nn.GELU() default.
        h = jax.nn.gelu(h, approximate=True)
    else:
        # exact erf form == torch.nn.GELU() default.
        h = 0.5 * h * (1.0 + jax.lax.erf(h * jnp.float32(0.7071067811865476)))

    # fc2 slab accumulate; cast activation to the weight dtype so bf16 weights
    # stay on the fast MXU path without re-casting weights per step.
    acc_ref[...] += jnp.dot(h.astype(w2_ref.dtype), w2_ref[...],
                            preferred_element_type=jnp.float32)

    @pl.when(k == pl.num_programs(1) - 1)
    def _():
        o_ref[...] = (acc_ref[...] + b2_ref[...].astype(jnp.float32)
                      ).astype(o_ref.dtype)


def mlp_pallas(x, w1, b1, w2, b2, *, tm=None, tk_hidden=None,
               approximate_gelu=False, vmem_limit_bytes=None):
    """x: (B, N, C_in) -> (B, N, C_out). Weights in (in, out) layout."""
    B, N, C_in = x.shape
    C_hid = w1.shape[1]
    C_out = w2.shape[1]
    M = B * N

    # ---- channel padding targets (lane-dense, multiples of 128) -----------
    C_in_p = _round_up(C_in, 128)
    C_out_p = _round_up(C_out, 128)
    C_hid_128 = _round_up(C_hid, 128)

    # Hidden-dim slab: keep the whole hidden dim resident when small/medium,
    # stream 512-wide slabs when large.
    if tk_hidden is None:
        tk_hidden = C_hid_128 if C_hid_128 <= 1024 else 512
    tk_hidden = min(_round_up(tk_hidden, 128), C_hid_128)
    n_k = _cdiv(C_hid_128, tk_hidden)
    C_hid_p = n_k * tk_hidden

    # ---- token dim: pad only to a multiple of 8 (sublane) if needed -------
    M_p = _round_up(M, 8)

    # Adaptive token tile.
    if tm is None:
        tm = 512 if (C_in_p + C_out_p) <= 1024 else 256
    tm = min(_round_up(tm, 8), M_p)
    n_i = _cdiv(M_p, tm)

    def _pad2(a, rows, cols):
        if a.shape == (rows, cols):
            return a
        return jnp.pad(a, ((0, rows - a.shape[0]), (0, cols - a.shape[1])))

    def _pad1(a, cols):
        if a.shape[0] == cols:
            return a.reshape(1, cols)
        return jnp.pad(a, (0, cols - a.shape[0])).reshape(1, cols)

    # Zero padding is exact: padded C_in columns meet zero w1 rows; padded
    # hidden columns have zero weight/bias so GELU(0)=0 feeds zero w2 rows;
    # padded C_out columns and token rows are sliced off.
    x2d = _pad2(x.reshape(M, C_in), M_p, C_in_p)
    w1p = _pad2(w1, C_in_p, C_hid_p)
    b1p = _pad1(b1, C_hid_p)
    w2p = _pad2(w2, C_hid_p, C_out_p)
    b2p = _pad1(b2, C_out_p)

    # ---- VMEM budget from actual buffer sizes ------------------------------
    if vmem_limit_bytes is None:
        wbuf = 1 if n_k == 1 else 2   # resident weights single-buffered
        est = (2 * tm * C_in_p * x2d.dtype.itemsize           # x tile (x2 bufs)
               + 2 * tm * C_out_p * x.dtype.itemsize          # out tile (x2)
               + wbuf * C_in_p * tk_hidden * w1p.dtype.itemsize
               + wbuf * tk_hidden * b1p.dtype.itemsize
               + wbuf * tk_hidden * C_out_p * w2p.dtype.itemsize
               + C_out_p * b2p.dtype.itemsize
               + tm * C_out_p * 4                              # f32 accumulator
               + tm * tk_hidden * 4)                           # live f32 h slab
        try:
            cap = int(pltpu.get_tpu_info().vmem_capacity_bytes) * 3 // 4
        except Exception:
            cap = 48 * 1024 * 1024   # safe on v5e / v6e / v7x
        vmem_limit_bytes = max(min(est * 3 // 2 + (4 << 20), cap), 16 << 20)

    kernel = functools.partial(_mlp_kernel, approximate_gelu=approximate_gelu)

    def _run(single_buffer_resident):
        def spec(shape, idx_map, resident):
            if resident and single_buffer_resident:
                # Constant-index operand: don't double-buffer it.
                return pl.BlockSpec(shape, idx_map,
                                    pipeline_mode=pl.Buffered(1))
            return pl.BlockSpec(shape, idx_map)

        weights_resident = (n_k == 1)
        in_specs = [
            spec((tm, C_in_p), lambda i, k: (i, 0), False),                    # x
            spec((C_in_p, tk_hidden), lambda i, k: (0, k), weights_resident),  # w1
            spec((1, tk_hidden), lambda i, k: (0, k), weights_resident),       # b1
            spec((tk_hidden, C_out_p), lambda i, k: (k, 0), weights_resident), # w2
            spec((1, C_out_p), lambda i, k: (0, 0), True),                     # b2
        ]
        return pl.pallas_call(
            kernel,
            out_shape=jax.ShapeDtypeStruct((M_p, C_out_p), x.dtype),
            grid_spec=pltpu.PrefetchScalarGridSpec(
                num_scalar_prefetch=0,
                grid=(n_i, n_k),
                in_specs=in_specs,
                out_specs=pl.BlockSpec((tm, C_out_p), lambda i, k: (i, 0)),
                scratch_shapes=[pltpu.VMEM((tm, C_out_p), jnp.float32)],
            ),
            compiler_params=pltpu.CompilerParams(
                dimension_semantics=("parallel", "arbitrary"),
                vmem_limit_bytes=int(vmem_limit_bytes),
            ),
        )(x2d, w1p, b1p, w2p, b2p)

    try:
        out2d = _run(True)
    except Exception:
        # pl.Buffered(1) not accepted on this jax version -> default buffering.
        out2d = _run(False)

    if M_p != M or C_out_p != C_out:
        out2d = out2d[:M, :C_out]
    return out2d.reshape(B, N, C_out)


def _reference_mlp(x, w1, b1, w2, b2):
    h = jnp.einsum("bnc,ch->bnh", x, w1) + b1
    h = 0.5 * h * (1.0 + jax.lax.erf(h / jnp.sqrt(2.0)))
    return jnp.einsum("bnh,ho->bno", h, w2) + b2


def _make_params(key, c_in, c_hid, c_out):
    kw1, kb1, kw2, kb2 = jax.random.split(key, 4)
    lim1 = 1.0 / float(jnp.sqrt(c_in))
    lim2 = 1.0 / float(jnp.sqrt(c_hid))
    w1 = jax.random.uniform(kw1, (c_in, c_hid), minval=-lim1, maxval=lim1,
                            dtype=jnp.float32)
    b1 = jax.random.uniform(kb1, (c_hid,), minval=-lim1, maxval=lim1,
                            dtype=jnp.float32)
    w2 = jax.random.uniform(kw2, (c_hid, c_out), minval=-lim2, maxval=lim2,
                            dtype=jnp.float32)
    b2 = jax.random.uniform(kb2, (c_out,), minval=-lim2, maxval=lim2,
                            dtype=jnp.float32)
    return w1, b1, w2, b2


if __name__ == "__main__":
    key = jax.random.PRNGKey(0)
    kx, kp1, kp2 = jax.random.split(key, 3)

    # Small shapes consistent with the module defaults (out_features=in_features).
    B, N = 2, 16
    in_features, hidden_features = 32, 64
    out_features = in_features

    x = jax.random.normal(kx, (B, N, in_features), dtype=jnp.float32)
    w1, b1, w2, b2 = _make_params(kp1, in_features, hidden_features, out_features)

    out = mlp_pallas(x, w1, b1, w2, b2)
    out = jax.block_until_ready(out)
    ref = _reference_mlp(x, w1, b1, w2, b2)
    assert out.shape == (B, N, out_features)
    assert jnp.allclose(out, ref, atol=2e-5, rtol=2e-5), "mismatch vs reference"

    # Second check: force multiple hidden-dim slabs to exercise the f32
    # accumulator / pl.when(init, finalize) path.
    hid2 = 384
    w1b, b1b, w2b, b2b = _make_params(kp2, in_features, hid2, out_features)
    out2 = mlp_pallas(x, w1b, b1b, w2b, b2b, tk_hidden=128)
    out2 = jax.block_until_ready(out2)
    ref2 = _reference_mlp(x, w1b, b1b, w2b, b2b)
    assert jnp.allclose(out2, ref2, atol=2e-5, rtol=2e-5), "mismatch (slabbed)"

    print("KERNEL_OK")
</pallas_src>

<mosaic_0001>
module attributes {stable_mosaic.version = 11 : i64} {
  func.func @_mlp_kernel(%arg0: i32, %arg1: i32, %arg2: memref<32x128xf32, #tpu.memory_space<vmem>>, %arg3: memref<128x128xf32, #tpu.memory_space<vmem>>, %arg4: memref<1x128xf32, #tpu.memory_space<vmem>>, %arg5: memref<128x128xf32, #tpu.memory_space<vmem>>, %arg6: memref<1x128xf32, #tpu.memory_space<vmem>>, %arg7: memref<32x128xf32, #tpu.memory_space<vmem>>, %arg8: memref<32x128xf32, #tpu.memory_space<vmem>>) attributes {dimension_semantics = [#tpu.dimension_semantics<parallel>, #tpu.dimension_semantics<arbitrary>], iteration_bounds = array<i64: 1, 1>, scalar_prefetch = 0 : i64, scratch_operands = 1 : i64, tpu.core_type = #tpu.core_type<tc>, window_params = [{transform_indices = @transform_0, window_bounds = array<i64: 32, 128>}, {pipeline_mode = #tpu.pipeline_mode<synchronous>, transform_indices = @transform_1, window_bounds = array<i64: 128, 128>}, {pipeline_mode = #tpu.pipeline_mode<synchronous>, transform_indices = @transform_2, window_bounds = array<i64: 1, 128>}, {pipeline_mode = #tpu.pipeline_mode<synchronous>, transform_indices = @transform_3, window_bounds = array<i64: 128, 128>}, {pipeline_mode = #tpu.pipeline_mode<synchronous>, transform_indices = @transform_4, window_bounds = array<i64: 1, 128>}, {transform_indices = @transform_5, window_bounds = array<i64: 32, 128>}]} {
    %c0_i32 = arith.constant 0 : i32
    %0 = arith.cmpi eq, %arg1, %c0_i32 : i32
    %1 = arith.extui %0 : i1 to i32
    %c0_i32_0 = arith.constant 0 : i32
    %2 = arith.cmpi ne, %1, %c0_i32_0 : i32
    scf.if %2 {
      %cst_18 = arith.constant 0.000000e+00 : f32
      %25 = vector.broadcast %cst_18 : f32 to vector<32x128xf32>
      %c0_19 = arith.constant 0 : index
      %c0_20 = arith.constant 0 : index
      %26 = vector.load %arg8[%c0_19, %c0_20] : memref<32x128xf32, #tpu.memory_space<vmem>>, vector<32x128xf32>
      tpu.vector_store %arg8[%c0_19, %c0_20], %25 {strides = array<i32>} : memref<32x128xf32, #tpu.memory_space<vmem>>, vector<32x128xf32>,
    } else {
    }
    %c0 = arith.constant 0 : index
    %c0_1 = arith.constant 0 : index
    %3 = vector.load %arg2[%c0, %c0_1] : memref<32x128xf32, #tpu.memory_space<vmem>>, vector<32x128xf32>
    %c0_2 = arith.constant 0 : index
    %c0_3 = arith.constant 0 : index
    %4 = vector.load %arg3[%c0_2, %c0_3] : memref<128x128xf32, #tpu.memory_space<vmem>>, vector<128x128xf32>
    %cst = arith.constant dense<0.000000e+00> : vector<32x128xf32>
    %5 = tpu.matmul %3, %4, %cst {dimension_numbers = #tpu.dot_dimension_numbers<[1], [0], [0], [1], [0, 0, 1, 1], [], []>} : vector<32x128xf32>, vector<128x128xf32>, vector<32x128xf32> -> vector<32x128xf32>
    %c0_4 = arith.constant 0 : index
    %c0_5 = arith.constant 0 : index
    %6 = vector.load %arg4[%c0_4, %c0_5] : memref<1x128xf32, #tpu.memory_space<vmem>>, vector<1x128xf32>
    %7 = vector.broadcast %6 : vector<1x128xf32> to vector<32x128xf32>
    %8 = arith.addf %5, %7 : vector<32x128xf32>
    %cst_6 = arith.constant 5.000000e-01 : f32
    %9 = vector.broadcast %cst_6 : f32 to vector<32x128xf32>
    %10 = arith.mulf %9, %8 : vector<32x128xf32>
    %cst_7 = arith.constant 0.707106769 : f32
    %11 = vector.broadcast %cst_7 : f32 to vector<32x128xf32>
    %12 = arith.mulf %8, %11 : vector<32x128xf32>
    %13 = math.erf %12 : vector<32x128xf32>
    %cst_8 = arith.constant 1.000000e+00 : f32
    %14 = vector.broadcast %cst_8 : f32 to vector<32x128xf32>
    %15 = arith.addf %14, %13 : vector<32x128xf32>
    %16 = arith.mulf %10, %15 : vector<32x128xf32>
    %c0_9 = arith.constant 0 : index
    %c0_10 = arith.constant 0 : index
    %17 = vector.load %arg8[%c0_9, %c0_10] : memref<32x128xf32, #tpu.memory_space<vmem>>, vector<32x128xf32>
    %c0_11 = arith.constant 0 : index
    %c0_12 = arith.constant 0 : index
    %18 = vector.load %arg5[%c0_11, %c0_12] : memref<128x128xf32, #tpu.memory_space<vmem>>, vector<128x128xf32>
    %cst_13 = arith.constant dense<0.000000e+00> : vector<32x128xf32>
    %19 = tpu.matmul %16, %18, %cst_13 {dimension_numbers = #tpu.dot_dimension_numbers<[1], [0], [0], [1], [0, 0, 1, 1], [], []>} : vector<32x128xf32>, vector<128x128xf32>, vector<32x128xf32> -> vector<32x128xf32>
    %20 = arith.addf %17, %19 : vector<32x128xf32>
    %c0_14 = arith.constant 0 : index
    %c0_15 = arith.constant 0 : index
    %21 = vector.load %arg8[%c0_14, %c0_15] : memref<32x128xf32, #tpu.memory_space<vmem>>, vector<32x128xf32>
    tpu.vector_store %arg8[%c0_14, %c0_15], %20 {strides = array<i32>} : memref<32x128xf32, #tpu.memory_space<vmem>>, vector<32x128xf32>,
    %c0_i32_16 = arith.constant 0 : i32
    %22 = arith.cmpi eq, %arg1, %c0_i32_16 : i32
    %23 = arith.extui %22 : i1 to i32
    %c0_i32_17 = arith.constant 0 : i32
    %24 = arith.cmpi ne, %23, %c0_i32_17 : i32
    scf.if %24 {
      %c0_18 = arith.constant 0 : index
      %c0_19 = arith.constant 0 : index
      %25 = vector.load %arg8[%c0_18, %c0_19] : memref<32x128xf32, #tpu.memory_space<vmem>>, vector<32x128xf32>
      %c0_20 = arith.constant 0 : index
      %c0_21 = arith.constant 0 : index
      %26 = vector.load %arg6[%c0_20, %c0_21] : memref<1x128xf32, #tpu.memory_space<vmem>>, vector<1x128xf32>
      %27 = vector.broadcast %26 : vector<1x128xf32> to vector<32x128xf32>
      %28 = arith.addf %25, %27 : vector<32x128xf32>
      %c0_22 = arith.constant 0 : index
      %c0_23 = arith.constant 0 : index
      %29 = vector.load %arg7[%c0_22, %c0_23] : memref<32x128xf32, #tpu.memory_space<vmem>>, vector<32x128xf32>
      tpu.vector_store %arg7[%c0_22, %c0_23], %28 {strides = array<i32>} : memref<32x128xf32, #tpu.memory_space<vmem>>, vector<32x128xf32>,
    } else {
    }
    return
  }
  func.func @transform_0(%arg0: i32, %arg1: i32) -> (i32, i32) {
    %c0_i32 = arith.constant 0 : i32
    %c0_i32_0 = arith.constant 0 : i32
    return %arg0, %c0_i32 : i32, i32
  }
  func.func @transform_1(%arg0: i32, %arg1: i32) -> (i32, i32) {
    %c0_i32 = arith.constant 0 : i32
    %c0_i32_0 = arith.constant 0 : i32
    return %c0_i32, %arg1 : i32, i32
  }
  func.func @transform_2(%arg0: i32, %arg1: i32) -> (i32, i32) {
    %c0_i32 = arith.constant 0 : i32
    %c0_i32_0 = arith.constant 0 : i32
    return %c0_i32, %arg1 : i32, i32
  }
  func.func @transform_3(%arg0: i32, %arg1: i32) -> (i32, i32) {
    %c0_i32 = arith.constant 0 : i32
    %c0_i32_0 = arith.constant 0 : i32
    return %arg1, %c0_i32 : i32, i32
  }
  func.func @transform_4(%arg0: i32, %arg1: i32) -> (i32, i32) {
    %c0_i32 = arith.constant 0 : i32
    %c0_i32_0 = arith.constant 0 : i32
    %c0_i32_1 = arith.constant 0 : i32
    return %c0_i32, %c0_i32_0 : i32, i32
  }
  func.func @transform_5(%arg0: i32, %arg1: i32) -> (i32, i32) {
    %c0_i32 = arith.constant 0 : i32
    %c0_i32_0 = arith.constant 0 : i32
    return %arg0, %c0_i32 : i32, i32
  }
}

module attributes {stable_mosaic.version = 11 : i64} {
  func.func @_mlp_kernel(%arg0: i32, %arg1: i32, %arg2: memref<32x128xf32, #tpu.memory_space<vmem>>, %arg3: memref<128x128xf32, #tpu.memory_space<vmem>>, %arg4: memref<1x128xf32, #tpu.memory_space<vmem>>, %arg5: memref<128x128xf32, #tpu.memory_space<vmem>>, %arg6: memref<1x128xf32, #tpu.memory_space<vmem>>, %arg7: memref<32x128xf32, #tpu.memory_space<vmem>>, %arg8: memref<32x128xf32, #tpu.memory_space<vmem>>) attributes {dimension_semantics = [#tpu.dimension_semantics<parallel>, #tpu.dimension_semantics<arbitrary>], iteration_bounds = array<i64: 1, 1>, scalar_prefetch = 0 : i64, scratch_operands = 1 : i64, tpu.core_type = #tpu.core_type<tc>, window_params = [{transform_indices = @transform_0, window_bounds = array<i64: 32, 128>}, {transform_indices = @transform_1, window_bounds = array<i64: 128, 128>}, {transform_indices = @transform_2, window_bounds = array<i64: 1, 128>}, {transform_indices = @transform_3, window_bounds = array<i64: 128, 128>}, {pipeline_mode = #tpu.pipeline_mode<synchronous>, transform_indices = @transform_4, window_bounds = array<i64: 1, 128>}, {transform_indices = @transform_5, window_bounds = array<i64: 32, 128>}]} {
    %c0_i32 = arith.constant 0 : i32
    %0 = arith.cmpi eq, %arg1, %c0_i32 : i32
    %1 = arith.extui %0 : i1 to i32
    %c0_i32_0 = arith.constant 0 : i32
    %2 = arith.cmpi ne, %1, %c0_i32_0 : i32
    scf.if %2 {
      %cst_18 = arith.constant 0.000000e+00 : f32
      %25 = vector.broadcast %cst_18 : f32 to vector<32x128xf32>
      %c0_19 = arith.constant 0 : index
      %c0_20 = arith.constant 0 : index
      %26 = vector.load %arg8[%c0_19, %c0_20] : memref<32x128xf32, #tpu.memory_space<vmem>>, vector<32x128xf32>
      tpu.vector_store %arg8[%c0_19, %c0_20], %25 {strides = array<i32>} : memref<32x128xf32, #tpu.memory_space<vmem>>, vector<32x128xf32>,
    } else {
    }
    %c0 = arith.constant 0 : index
    %c0_1 = arith.constant 0 : index
    %3 = vector.load %arg2[%c0, %c0_1] : memref<32x128xf32, #tpu.memory_space<vmem>>, vector<32x128xf32>
    %c0_2 = arith.constant 0 : index
    %c0_3 = arith.constant 0 : index
    %4 = vector.load %arg3[%c0_2, %c0_3] : memref<128x128xf32, #tpu.memory_space<vmem>>, vector<128x128xf32>
    %cst = arith.constant dense<0.000000e+00> : vector<32x128xf32>
    %5 = tpu.matmul %3, %4, %cst {dimension_numbers = #tpu.dot_dimension_numbers<[1], [0], [0], [1], [0, 0, 1, 1], [], []>} : vector<32x128xf32>, vector<128x128xf32>, vector<32x128xf32> -> vector<32x128xf32>
    %c0_4 = arith.constant 0 : index
    %c0_5 = arith.constant 0 : index
    %6 = vector.load %arg4[%c0_4, %c0_5] : memref<1x128xf32, #tpu.memory_space<vmem>>, vector<1x128xf32>
    %7 = vector.broadcast %6 : vector<1x128xf32> to vector<32x128xf32>
    %8 = arith.addf %5, %7 : vector<32x128xf32>
    %cst_6 = arith.constant 5.000000e-01 : f32
    %9 = vector.broadcast %cst_6 : f32 to vector<32x128xf32>
    %10 = arith.mulf %9, %8 : vector<32x128xf32>
    %cst_7 = arith.constant 0.707106769 : f32
    %11 = vector.broadcast %cst_7 : f32 to vector<32x128xf32>
    %12 = arith.mulf %8, %11 : vector<32x128xf32>
    %13 = math.erf %12 : vector<32x128xf32>
    %cst_8 = arith.constant 1.000000e+00 : f32
    %14 = vector.broadcast %cst_8 : f32 to vector<32x128xf32>
    %15 = arith.addf %14, %13 : vector<32x128xf32>
    %16 = arith.mulf %10, %15 : vector<32x128xf32>
    %c0_9 = arith.constant 0 : index
    %c0_10 = arith.constant 0 : index
    %17 = vector.load %arg8[%c0_9, %c0_10] : memref<32x128xf32, #tpu.memory_space<vmem>>, vector<32x128xf32>
    %c0_11 = arith.constant 0 : index
    %c0_12 = arith.constant 0 : index
    %18 = vector.load %arg5[%c0_11, %c0_12] : memref<128x128xf32, #tpu.memory_space<vmem>>, vector<128x128xf32>
    %cst_13 = arith.constant dense<0.000000e+00> : vector<32x128xf32>
    %19 = tpu.matmul %16, %18, %cst_13 {dimension_numbers = #tpu.dot_dimension_numbers<[1], [0], [0], [1], [0, 0, 1, 1], [], []>} : vector<32x128xf32>, vector<128x128xf32>, vector<32x128xf32> -> vector<32x128xf32>
    %20 = arith.addf %17, %19 : vector<32x128xf32>
    %c0_14 = arith.constant 0 : index
    %c0_15 = arith.constant 0 : index
    %21 = vector.load %arg8[%c0_14, %c0_15] : memref<32x128xf32, #tpu.memory_space<vmem>>, vector<32x128xf32>
    tpu.vector_store %arg8[%c0_14, %c0_15], %20 {strides = array<i32>} : memref<32x128xf32, #tpu.memory_space<vmem>>, vector<32x128xf32>,
    %c0_i32_16 = arith.constant 0 : i32
    %22 = arith.cmpi eq, %arg1, %c0_i32_16 : i32
    %23 = arith.extui %22 : i1 to i32
    %c0_i32_17 = arith.constant 0 : i32
    %24 = arith.cmpi ne, %23, %c0_i32_17 : i32
    scf.if %24 {
      %c0_18 = arith.constant 0 : index
      %c0_19 = arith.constant 0 : index
      %25 = vector.load %arg8[%c0_18, %c0_19] : memref<32x128xf32, #tpu.memory_space<vmem>>, vector<32x128xf32>
      %c0_20 = arith.constant 0 : index
      %c0_21 = arith.constant 0 : index
      %26 = vector.load %arg6[%c0_20, %c0_21] : memref<1x128xf32, #tpu.memory_space<vmem>>, vector<1x128xf32>
      %27 = vector.broadcast %26 : vector<1x128xf32> to vector<32x128xf32>
      %28 = arith.addf %25, %27 : vector<32x128xf32>
      %c0_22 = arith.constant 0 : index
      %c0_23 = arith.constant 0 : index
      %29 = vector.load %arg7[%c0_22, %c0_23] : memref<32x128xf32, #tpu.memory_space<vmem>>, vector<32x128xf32>
      tpu.vector_store %arg7[%c0_22, %c0_23], %28 {strides = array<i32>} : memref<32x128xf32, #tpu.memory_space<vmem>>, vector<32x128xf32>,
    } else {
    }
    return
  }
  func.func @transform_0(%arg0: i32, %arg1: i32) -> (i32, i32) {
    %c0_i32 = arith.constant 0 : i32
    %c0_i32_0 = arith.constant 0 : i32
    return %arg0, %c0_i32 : i32, i32
  }
  func.func @transform_1(%arg0: i32, %arg1: i32) -> (i32, i32) {
    %c0_i32 = arith.constant 0 : i32
    %c0_i32_0 = arith.constant 0 : i32
    return %c0_i32, %arg1 : i32, i32
  }
  func.func @transform_2(%arg0: i32, %arg1: i32) -> (i32, i32) {
    %c0_i32 = arith.constant 0 : i32
    %c0_i32_0 = arith.constant 0 : i32
    return %c0_i32, %arg1 : i32, i32
  }
  func.func @transform_3(%arg0: i32, %arg1: i32) -> (i32, i32) {
    %c0_i32 = arith.constant 0 : i32
    %c0_i32_0 = arith.constant 0 : i32
    return %arg1, %c0_i32 : i32, i32
  }
  func.func @transform_4(%arg0: i32, %arg1: i32) -> (i32, i32) {
    %c0_i32 = arith.constant 0 : i32
    %c0_i32_0 = arith.constant 0 : i32
    %c0_i32_1 = arith.constant 0 : i32
    return %c0_i32, %c0_i32_0 : i32, i32
  }
  func.func @transform_5(%arg0: i32, %arg1: i32) -> (i32, i32) {
    %c0_i32 = arith.constant 0 : i32
    %c0_i32_0 = arith.constant 0 : i32
    return %arg0, %c0_i32 : i32, i32
  }
}

</mosaic_0001>

<llo_original>
// kernel: tpu_custom_call.1
$region0: #{tpu_custom_call.1}
  #allocation0 [shape = 'u32[]', space=smem, size = 0x4, offset = 0x4, fixed_abs, tag = 'smem constant byte address 0x4 - core index']
  #allocation1 [shape = 'u32[144,128]{1,0:T(1,128)}', space=vmem, size = 0x12000, scoped, tag = 'internal scratch']
  #allocation2 [shape = 'f32[32,128]{1,0:T(8,128)}', space=vmem, size = 0x4000, scoped, tag = 'scratch operand']
  %s0 = inlined_call_operand.hbm [shape: f32[32,128], index: 0, kind: input, shape index: {}]
  %s1 = inlined_call_operand.hbm [shape: f32[128,128], index: 1, kind: input, shape index: {}]
  %s2 = inlined_call_operand.vmem [shape: f32[1,128], index: 2, kind: input, shape index: {}]
  %s3 = inlined_call_operand.hbm [shape: f32[128,128], index: 3, kind: input, shape index: {}]
  %s4 = inlined_call_operand.vmem [shape: f32[1,128], index: 4, kind: input, shape index: {}]
  %s5 = inlined_call_operand.hbm [shape: f32[32,128], index: 5, kind: output, shape index: {}]
  %s6 = sld [smem:[#allocation0]]
  $region50: #{tpu_custom_call.1} parent=0
    _
  %s8 = ssub.s32 1, %s6
  %s9 = scalar_select 0, %s8, %s6
  $region1: #{tpu_custom_call.1} parent=0
    #allocation3 [shape = 'u8[16384]{0}', space=vmem, size = 0x4000, scoped, tag = 'input window, operand 0, single buffered']
    #allocation4 [shape = 's32[1]{0}', space=sflag, size = 0x4, scoped, tag = 'scoped memory for tpu_custom_call.1']
    #allocation5 [shape = 's32[1]{0}', space=sflag, size = 0x4, scoped, tag = 'scoped memory for tpu_custom_call.1']
    #allocation6 [shape = 'u8[65536]{0}', space=vmem, size = 0x10000, scoped, tag = 'input window, operand 1, single buffered']
    #allocation7 [shape = 's32[1]{0}', space=sflag, size = 0x4, scoped, tag = 'scoped memory for tpu_custom_call.1']
    #allocation8 [shape = 'u8[65536]{0}', space=vmem, size = 0x10000, scoped, tag = 'input window, operand 3, single buffered']
    #allocation9 [shape = 'u8[16384]{0}', space=vmem, size = 0x4000, scoped, tag = 'output window, operand 0, single buffered']
    %10 = vsyncpa [#allocation4], 0
    %11 = vsyncpa [#allocation7], 0
    %12 = vsyncpa [#allocation5], 0
    // Predicated region
    $region2: #{tpu_custom_call.1} parent=1 // pred_check
      _
    $region3: #{tpu_custom_call.1} parent=1 // pred_check_branch
      %14 = sbr.rel (0) target = $region5
    $region4: #{tpu_custom_call.1} parent=1 // pred_region
      %s16 = ssub.s32 512, 512
      %17 = vsyncadd [#allocation4], %s16
      %s18 = sshll.u32 [#allocation3], 4
      %s19 = int_to_ptr.vmem [resolvable:$true] %s18
      %24 = dma.hbm_to_vmem [thread:$0]  %s0, 512, %s19, [#allocation4], 128, 128, 8
    $region5: #{tpu_custom_call.1} parent=1 // pred_fallthru
      _
    // Predicated region
    $region6: #{tpu_custom_call.1} parent=1 // pred_check
      _
    $region7: #{tpu_custom_call.1} parent=1 // pred_check_branch
      %26 = sbr.rel (0) target = $region9
    $region8: #{tpu_custom_call.1} parent=1 // pred_region
      %s28 = ssub.s32 2048, 2048
      %29 = vsyncadd [#allocation7], %s28
      %s30 = sshll.u32 [#allocation6], 4
      %s31 = int_to_ptr.vmem [resolvable:$true] %s30
      %36 = dma.hbm_to_vmem [thread:$0]  %s1, 2048, %s31, [#allocation7], 128, 128, 8
    $region9: #{tpu_custom_call.1} parent=1 // pred_fallthru
      _
    // Predicated region
    $region10: #{tpu_custom_call.1} parent=1 // pred_check
      _
    $region11: #{tpu_custom_call.1} parent=1 // pred_check_branch
      %38 = sbr.rel (0) target = $region13
    $region12: #{tpu_custom_call.1} parent=1 // pred_region
      _
    $region13: #{tpu_custom_call.1} parent=1 // pred_fallthru
      _
    // Predicated region
    $region14: #{tpu_custom_call.1} parent=1 // pred_check
      _
    $region15: #{tpu_custom_call.1} parent=1 // pred_check_branch
      %40 = sbr.rel (0) target = $region17
    $region16: #{tpu_custom_call.1} parent=1 // pred_region
      %s42 = ssub.s32 2048, 2048
      %43 = vsyncadd [#allocation7], %s42
      %s44 = sshll.u32 [#allocation8], 4
      %s45 = int_to_ptr.vmem [resolvable:$true] %s44
      %50 = dma.hbm_to_vmem [thread:$0]  %s3, 2048, %s45, [#allocation7], 128, 128, 8
    $region17: #{tpu_custom_call.1} parent=1 // pred_fallthru
      _
    // Predicated region
    $region18: #{tpu_custom_call.1} parent=1 // pred_check
      _
    $region19: #{tpu_custom_call.1} parent=1 // pred_check_branch
      %52 = sbr.rel (0) target = $region21
    $region20: #{tpu_custom_call.1} parent=1 // pred_region
      _
    $region21: #{tpu_custom_call.1} parent=1 // pred_fallthru
      _
    // Predicated region
    $region22: #{tpu_custom_call.1} parent=1 // pred_check
      _
    $region23: #{tpu_custom_call.1} parent=1 // pred_check_branch
      %54 = sbr.rel (0) target = $region25
    $region24: #{tpu_custom_call.1} parent=1 // pred_region
      %55 = dma.done [#allocation4], 512
    $region25: #{tpu_custom_call.1} parent=1 // pred_fallthru
      _
    // Predicated region
    $region26: #{tpu_custom_call.1} parent=1 // pred_check
      _
    $region27: #{tpu_custom_call.1} parent=1 // pred_check_branch
      %57 = sbr.rel (0) target = $region29
    $region28: #{tpu_custom_call.1} parent=1 // pred_region
      %58 = dma.done [#allocation7], 2048
    $region29: #{tpu_custom_call.1} parent=1 // pred_fallthru
      _
    // Predicated region
    $region30: #{tpu_custom_call.1} parent=1 // pred_check
      _
    $region31: #{tpu_custom_call.1} parent=1 // pred_check_branch
      %60 = sbr.rel (0) target = $region33
    $region32: #{tpu_custom_call.1} parent=1 // pred_region
      %61 = dma.done [#allocation7], 2048
    $region33: #{tpu_custom_call.1} parent=1 // pred_fallthru
      _
    %p62 = scmp.eq.s32.totalorder 0, 0
    // Predicated region
    $region34: #{tpu_custom_call.1} parent=1 // pred_check
      %p63 = pneg %p62
    $region35: #{tpu_custom_call.1} parent=1 // pred_check_branch
      %65 = sbr.rel (%p63) target = $region37
    $region36: #{tpu_custom_call.1} parent=1 // pred_region
      %66 = vst [vmem:[#allocation2] sm:$0xff] 0.0
      %67 = vst [vmem:[#allocation2 + $0x8] sm:$0xff] 0.0
      %68 = vst [vmem:[#allocation2 + $0x10] sm:$0xff] 0.0
      %69 = vst [vmem:[#allocation2 + $0x18] sm:$0xff] 0.0
    $region37: #{tpu_custom_call.1} parent=1 // pred_fallthru
      _
    %v70 = vld [vmem:[#allocation3] sm:$0xff]
    %v71 = vld [vmem:[#allocation3 + $0x8] sm:$0xff]
    %v72 = vld [vmem:[#allocation3 + $0x10] sm:$0xff]
    %v73 = vld [vmem:[#allocation3 + $0x18] sm:$0xff]
    %v74 = vld [vmem:[#allocation6] sm:$0xff]
    %v75 = vld [vmem:[#allocation6 + $0x8] sm:$0xff]
    %v76 = vld [vmem:[#allocation6 + $0x10] sm:$0xff]
    %v77 = vld [vmem:[#allocation6 + $0x18] sm:$0xff]
    %v78 = vld [vmem:[#allocation6 + $0x20] sm:$0xff]
    %v79 = vld [vmem:[#allocation6 + $0x28] sm:$0xff]
    %v80 = vld [vmem:[#allocation6 + $0x30] sm:$0xff]
    %v81 = vld [vmem:[#allocation6 + $0x38] sm:$0xff]
    %v82 = vld [vmem:[#allocation6 + $0x40] sm:$0xff]
    %v83 = vld [vmem:[#allocation6 + $0x48] sm:$0xff]
    %v84 = vld [vmem:[#allocation6 + $0x50] sm:$0xff]
    %v85 = vld [vmem:[#allocation6 + $0x58] sm:$0xff]
    %v86 = vld [vmem:[#allocation6 + $0x60] sm:$0xff]
    %v87 = vld [vmem:[#allocation6 + $0x68] sm:$0xff]
    %v88 = vld [vmem:[#allocation6 + $0x70] sm:$0xff]
    %v89 = vld [vmem:[#allocation6 + $0x78] sm:$0xff]
    %v90 = vld [vmem:[%s2] sm:$0x1]
    %v92 = vlaneseq
    %v93 = vshrl.u32 %v92, 7
    %v94 = vsub.s32 0, %v93
    %v95 = vrot.slane %v90, %v94
    %97 = vmatprep.subr.mxu0 0.0
    %98 = vmatpush1.msra.mxu0 %v89
    %99 = vmatprep.subr.mxu0 0.0
    %100 = vmatpush1.msra.mxu0 %v88
    %101 = vmatprep.subr.mxu0 0.0
    %102 = vmatpush1.msra.mxu0 %v87
    %103 = vmatprep.subr.mxu0 0.0
    %104 = vmatpush1.msra.mxu0 %v86
    %105 = vmatprep.subr.mxu0 0.0
    %106 = vmatpush1.msra.mxu0 %v85
    %107 = vmatprep.subr.mxu0 0.0
    %108 = vmatpush1.msra.mxu0 %v84
    %109 = vmatprep.subr.mxu0 0.0
    %110 = vmatpush1.msra.mxu0 %v83
    %111 = vmatprep.subr.mxu0 0.0
    %112 = vmatpush1.msra.mxu0 %v82
    %113 = vmatprep.subr.mxu0 0.0
    %114 = vmatpush1.msra.mxu0 %v81
    %115 = vmatprep.subr.mxu0 0.0
    %116 = vmatpush1.msra.mxu0 %v80
    %117 = vmatprep.subr.mxu0 0.0
    %118 = vmatpush1.msra.mxu0 %v79
    %119 = vmatprep.subr.mxu0 0.0
    %120 = vmatpush1.msra.mxu0 %v78
    %121 = vmatprep.subr.mxu0 0.0
    %122 = vmatpush1.msra.mxu0 %v77
    %123 = vmatprep.subr.mxu0 0.0
    %124 = vmatpush1.msra.mxu0 %v76
    %125 = vmatprep.subr.mxu0 0.0
    %126 = vmatpush1.msra.mxu0 %v75
    %127 = vmatprep.subr.mxu0 0.0
    %128 = vmatpush1.msra.mxu0 %v74
    %129 = vmatprep.subr.mxu0 0.0
    %130 = vmatpush2.msra.mxu0 0.0
    %131 = vmatprep.subr.mxu0 0.0
    %132 = vmatpush2.msra.mxu0 0.0
    %133 = vmatprep.subr.mxu0 0.0
    %134 = vmatpush2.msra.mxu0 0.0
    %135 = vmatprep.subr.mxu0 0.0
    %136 = vmatpush2.msra.mxu0 0.0
    %137 = vmatprep.subr.mxu0 0.0
    %138 = vmatpush2.msra.mxu0 0.0
    %139 = vmatprep.subr.mxu0 0.0
    %140 = vmatpush2.msra.mxu0 0.0
    %141 = vmatprep.subr.mxu0 0.0
    %142 = vmatpush2.msra.mxu0 0.0
    %143 = vmatprep.subr.mxu0 0.0
    %144 = vmatpush2.msra.mxu0 0.0
    %145 = vmatprep.subr.mxu0 0.0
    %146 = vmatpush2.msra.mxu0 0.0
    %147 = vmatprep.subr.mxu0 0.0
    %148 = vmatpush2.msra.mxu0 0.0
    %149 = vmatprep.subr.mxu0 0.0
    %150 = vmatpush2.msra.mxu0 0.0
    %151 = vmatprep.subr.mxu0 0.0
    %152 = vmatpush2.msra.mxu0 0.0
    %153 = vmatprep.subr.mxu0 0.0
    %154 = vmatpush2.msra.mxu0 0.0
    %155 = vmatprep.subr.mxu0 0.0
    %156 = vmatpush2.msra.mxu0 0.0
    %157 = vmatprep.subr.mxu0 0.0
    %158 = vmatpush2.msra.mxu0 0.0
    %159 = vmatprep.subr.mxu0 0.0
    %160 = vmatpush2.msra.mxu0 0.0
    %161 = vmatprep.mubr.f32.mxu0 0.0
    %162 = vmatmul.mubr.f32.gmra.mxu0 %v70
    %v163 = vpop.f32.mrf.mxu0
    %v164 = vadd.f32 %v95, %v163
    %v165 = vpop.f32.mrf.mxu0
    %166 = vmatprep.mubr.f32.mxu0 0.0
    %167 = vmatmul.mubr.f32.gmra.mxu0 %v71
    %v168 = vpop.f32.mrf.mxu0
    %v169 = vadd.f32 %v95, %v168
    %v170 = vpop.f32.mrf.mxu0
    %171 = vmatprep.mubr.f32.mxu0 0.0
    %172 = vmatmul.mubr.f32.gmra.mxu0 %v72
    %v173 = vpop.f32.mrf.mxu0
    %v174 = vadd.f32 %v95, %v173
    %v175 = vpop.f32.mrf.mxu0
    %176 = vmatprep.mubr.f32.mxu0 0.0
    %177 = vmatmul.mubr.f32.gmra.mxu0 %v73
    %v178 = vpop.f32.mrf.mxu0
    %v179 = vadd.f32 %v95, %v178
    %v180 = vpop.f32.mrf.mxu0
    %181 = vdwg.mxu0
    %v182 = vmul.f32 %v164, 0.5
    %v183 = vmul.f32 %v169, 0.5
    %v184 = vmul.f32 %v174, 0.5
    %v185 = vmul.f32 %v179, 0.5
    %v186 = vmul.f32 %v164, 0.70710677
    %v187 = vmul.f32 %v169, 0.70710677
    %v188 = vmul.f32 %v174, 0.70710677
    %v189 = vmul.f32 %v179, 0.70710677
    %v190 = verf.f32.pop %v186
    %v191 = verf.f32.pop %v187
    %v192 = verf.f32.pop %v188
    %v193 = verf.f32.pop %v189
    %v194 = vadd.f32 %v190, 1.0
    %v195 = vadd.f32 %v191, 1.0
    %v196 = vadd.f32 %v192, 1.0
    %v197 = vadd.f32 %v193, 1.0
    %v198 = vmul.f32 %v182, %v194
    %v199 = vmul.f32 %v183, %v195
    %v200 = vmul.f32 %v184, %v196
    %v201 = vmul.f32 %v185, %v197
    %v202 = vld [vmem:[#allocation2] sm:$0xff]
    %v203 = vld [vmem:[#allocation2 + $0x8] sm:$0xff]
    %v204 = vld [vmem:[#allocation2 + $0x10] sm:$0xff]
    %v205 = vld [vmem:[#allocation2 + $0x18] sm:$0xff]
    %v206 = vld [vmem:[#allocation8] sm:$0xff]
    %v207 = vld [vmem:[#allocation8 + $0x8] sm:$0xff]
    %v208 = vld [vmem:[#allocation8 + $0x10] sm:$0xff]
    %v209 = vld [vmem:[#allocation8 + $0x18] sm:$0xff]
    %v210 = vld [vmem:[#allocation8 + $0x20] sm:$0xff]
    %v211 = vld [vmem:[#allocation8 + $0x28] sm:$0xff]
    %v212 = vld [vmem:[#allocation8 + $0x30] sm:$0xff]
    %v213 = vld [vmem:[#allocation8 + $0x38] sm:$0xff]
    %v214 = vld [vmem:[#allocation8 + $0x40] sm:$0xff]
    %v215 = vld [vmem:[#allocation8 + $0x48] sm:$0xff]
    %v216 = vld [vmem:[#allocation8 + $0x50] sm:$0xff]
    %v217 = vld [vmem:[#allocation8 + $0x58] sm:$0xff]
    %v218 = vld [vmem:[#allocation8 + $0x60] sm:$0xff]
    %v219 = vld [vmem:[#allocation8 + $0x68] sm:$0xff]
    %v220 = vld [vmem:[#allocation8 + $0x70] sm:$0xff]
    %v221 = vld [vmem:[#allocation8 + $0x78] sm:$0xff]
    %222 = vmatprep.subr.mxu0 0.0
    %223 = vmatpush1.msra.mxu0 %v221
    %224 = vmatprep.subr.mxu0 0.0
    %225 = vmatpush1.msra.mxu0 %v220
    %226 = vmatprep.subr.mxu0 0.0
    %227 = vmatpush1.msra.mxu0 %v219
    %228 = vmatprep.subr.mxu0 0.0
    %229 = vmatpush1.msra.mxu0 %v218
    %230 = vmatprep.subr.mxu0 0.0
    %231 = vmatpush1.msra.mxu0 %v217
    %232 = vmatprep.subr.mxu0 0.0
    %233 = vmatpush1.msra.mxu0 %v216
    %234 = vmatprep.subr.mxu0 0.0
    %235 = vmatpush1.msra.mxu0 %v215
    %236 = vmatprep.subr.mxu0 0.0
    %237 = vmatpush1.msra.mxu0 %v214
    %238 = vmatprep.subr.mxu0 0.0
    %239 = vmatpush1.msra.mxu0 %v213
    %240 = vmatprep.subr.mxu0 0.0
    %241 = vmatpush1.msra.mxu0 %v212
    %242 = vmatprep.subr.mxu0 0.0
    %243 = vmatpush1.msra.mxu0 %v211
    %244 = vmatprep.subr.mxu0 0.0
    %245 = vmatpush1.msra.mxu0 %v210
    %246 = vmatprep.subr.mxu0 0.0
    %247 = vmatpush1.msra.mxu0 %v209
    %248 = vmatprep.subr.mxu0 0.0
    %249 = vmatpush1.msra.mxu0 %v208
    %250 = vmatprep.subr.mxu0 0.0
    %251 = vmatpush1.msra.mxu0 %v207
    %252 = vmatprep.subr.mxu0 0.0
    %253 = vmatpush1.msra.mxu0 %v206
    %254 = vmatprep.subr.mxu0 0.0
    %255 = vmatpush2.msra.mxu0 0.0
    %256 = vmatprep.subr.mxu0 0.0
    %257 = vmatpush2.msra.mxu0 0.0
    %258 = vmatprep.subr.mxu0 0.0
    %259 = vmatpush2.msra.mxu0 0.0
    %260 = vmatprep.subr.mxu0 0.0
    %261 = vmatpush2.msra.mxu0 0.0
    %262 = vmatprep.subr.mxu0 0.0
    %263 = vmatpush2.msra.mxu0 0.0
    %264 = vmatprep.subr.mxu0 0.0
    %265 = vmatpush2.msra.mxu0 0.0
    %266 = vmatprep.subr.mxu0 0.0
    %267 = vmatpush2.msra.mxu0 0.0
    %268 = vmatprep.subr.mxu0 0.0
    %269 = vmatpush2.msra.mxu0 0.0
    %270 = vmatprep.subr.mxu0 0.0
    %271 = vmatpush2.msra.mxu0 0.0
    %272 = vmatprep.subr.mxu0 0.0
    %273 = vmatpush2.msra.mxu0 0.0
    %274 = vmatprep.subr.mxu0 0.0
    %275 = vmatpush2.msra.mxu0 0.0
    %276 = vmatprep.subr.mxu0 0.0
    %277 = vmatpush2.msra.mxu0 0.0
    %278 = vmatprep.subr.mxu0 0.0
    %279 = vmatpush2.msra.mxu0 0.0
    %280 = vmatprep.subr.mxu0 0.0
    %281 = vmatpush2.msra.mxu0 0.0
    %282 = vmatprep.subr.mxu0 0.0
    %283 = vmatpush2.msra.mxu0 0.0
    %284 = vmatprep.subr.mxu0 0.0
    %285 = vmatpush2.msra.mxu0 0.0
    %286 = vmatprep.mubr.f32.mxu0 0.0
    %287 = vmatmul.mubr.f32.gmra.mxu0 %v198
    %v288 = vpop.f32.mrf.mxu0
    %v289 = vadd.f32 0.0, %v288
    %v290 = vpop.f32.mrf.mxu0
    %291 = vmatprep.mubr.f32.mxu0 0.0
    %292 = vmatmul.mubr.f32.gmra.mxu0 %v199
    %v293 = vpop.f32.mrf.mxu0
    %v294 = vadd.f32 0.0, %v293
    %v295 = vpop.f32.mrf.mxu0
    %296 = vmatprep.mubr.f32.mxu0 0.0
    %297 = vmatmul.mubr.f32.gmra.mxu0 %v200
    %v298 = vpop.f32.mrf.mxu0
    %v299 = vadd.f32 0.0, %v298
    %v300 = vpop.f32.mrf.mxu0
    %301 = vmatprep.mubr.f32.mxu0 0.0
    %302 = vmatmul.mubr.f32.gmra.mxu0 %v201
    %v303 = vpop.f32.mrf.mxu0
    %v304 = vadd.f32 0.0, %v303
    %v305 = vpop.f32.mrf.mxu0
    %306 = vdwg.mxu0
    %v307 = vadd.f32 %v202, %v289
    %v308 = vadd.f32 %v203, %v294
    %v309 = vadd.f32 %v204, %v299
    %v310 = vadd.f32 %v205, %v304
    %311 = vst [vmem:[#allocation2] sm:$0xff] %v307
    %312 = vst [vmem:[#allocation2 + $0x8] sm:$0xff] %v308
    %313 = vst [vmem:[#allocation2 + $0x10] sm:$0xff] %v309
    %314 = vst [vmem:[#allocation2 + $0x18] sm:$0xff] %v310
    // Predicated region
    $region38: #{tpu_custom_call.1} parent=1 // pred_check
      %p315 = pneg %p62
    $region39: #{tpu_custom_call.1} parent=1 // pred_check_branch
      %317 = sbr.rel (%p315) target = $region41
    $region40: #{tpu_custom_call.1} parent=1 // pred_region
      %v318 = vld [vmem:[#allocation2] sm:$0xff]
      %v319 = vld [vmem:[#allocation2 + $0x8] sm:$0xff]
      %v320 = vld [vmem:[#allocation2 + $0x10] sm:$0xff]
      %v321 = vld [vmem:[#allocation2 + $0x18] sm:$0xff]
      %v322 = vld [vmem:[%s4] sm:$0x1]
      %v324 = vlaneseq
      %v325 = vshrl.u32 %v324, 7
      %v326 = vsub.s32 0, %v325
      %v327 = vrot.slane %v322, %v326
      %v329 = vadd.f32 %v318, %v327
      %v330 = vadd.f32 %v319, %v327
      %v331 = vadd.f32 %v320, %v327
      %v332 = vadd.f32 %v321, %v327
      %333 = vst [vmem:[#allocation9] sm:$0xff] %v329
      %334 = vst [vmem:[#allocation9 + $0x8] sm:$0xff] %v330
      %335 = vst [vmem:[#allocation9 + $0x10] sm:$0xff] %v331
      %336 = vst [vmem:[#allocation9 + $0x18] sm:$0xff] %v332
    $region41: #{tpu_custom_call.1} parent=1 // pred_fallthru
      _
    // Predicated region
    $region42: #{tpu_custom_call.1} parent=1 // pred_check
      _
    $region43: #{tpu_custom_call.1} parent=1 // pred_check_branch
      %338 = sbr.rel (0) target = $region45
    $region44: #{tpu_custom_call.1} parent=1 // pred_region
      %s340 = ssub.s32 512, 512
      %341 = vsyncadd [#allocation5], %s340
      %s342 = sshll.u32 [#allocation9], 4
      %s343 = int_to_ptr.vmem [resolvable:$true] %s342
      %348 = dma.vmem_to_hbm [thread:$0]  %s343, 512, %s5, [#allocation5], 128, 128, 8
    $region45: #{tpu_custom_call.1} parent=1 // pred_fallthru
      _
    // Predicated region
    $region46: #{tpu_custom_call.1} parent=1 // pred_check
      _
    $region47: #{tpu_custom_call.1} parent=1 // pred_check_branch
      %350 = sbr.rel (0) target = $region49
    $region48: #{tpu_custom_call.1} parent=1 // pred_region
      %351 = dma.done [#allocation5], 512
    $region49: #{tpu_custom_call.1} parent=1 // pred_fallthru
      _
    %352 = vsyncpa [#allocation4], 1
    %353 = vsyncpa [#allocation7], 1
    %354 = vsyncpa [#allocation5], 1

// kernel: tpu_custom_call.1
$region0: #{tpu_custom_call.1}
  #allocation0 [shape = 'u32[]', space=smem, size = 0x4, offset = 0x4, fixed_abs, tag = 'smem constant byte address 0x4 - core index']
  #allocation1 [shape = 'u32[144,128]{1,0:T(1,128)}', space=vmem, size = 0x12000, scoped, tag = 'internal scratch']
  #allocation2 [shape = 'f32[32,128]{1,0:T(8,128)}', space=vmem, size = 0x4000, scoped, tag = 'scratch operand']
  %s0 = inlined_call_operand.hbm [shape: f32[32,128], index: 0, kind: input, shape index: {}]
  %s1 = inlined_call_operand.hbm [shape: f32[128,128], index: 1, kind: input, shape index: {}]
  %s2 = inlined_call_operand.vmem [shape: f32[1,128], index: 2, kind: input, shape index: {}]
  %s3 = inlined_call_operand.hbm [shape: f32[128,128], index: 3, kind: input, shape index: {}]
  %s4 = inlined_call_operand.vmem [shape: f32[1,128], index: 4, kind: input, shape index: {}]
  %s5 = inlined_call_operand.hbm [shape: f32[32,128], index: 5, kind: output, shape index: {}]
  %s6 = sld [smem:[#allocation0]]
  $region50: #{tpu_custom_call.1} parent=0
    _
  %s8 = ssub.s32 1, %s6
  %s9 = scalar_select 0, %s8, %s6
  $region1: #{tpu_custom_call.1} parent=0
    #allocation3 [shape = 'u8[16384]{0}', space=vmem, size = 0x4000, scoped, tag = 'input window, operand 0, single buffered']
    #allocation4 [shape = 's32[1]{0}', space=sflag, size = 0x4, scoped, tag = 'scoped memory for tpu_custom_call.1']
    #allocation5 [shape = 's32[1]{0}', space=sflag, size = 0x4, scoped, tag = 'scoped memory for tpu_custom_call.1']
    #allocation6 [shape = 'u8[65536]{0}', space=vmem, size = 0x10000, scoped, tag = 'input window, operand 1, single buffered']
    #allocation7 [shape = 's32[1]{0}', space=sflag, size = 0x4, scoped, tag = 'scoped memory for tpu_custom_call.1']
    #allocation8 [shape = 'u8[65536]{0}', space=vmem, size = 0x10000, scoped, tag = 'input window, operand 3, single buffered']
    #allocation9 [shape = 'u8[16384]{0}', space=vmem, size = 0x4000, scoped, tag = 'output window, operand 0, single buffered']
    %10 = vsyncpa [#allocation4], 0
    %11 = vsyncpa [#allocation7], 0
    %12 = vsyncpa [#allocation5], 0
    // Predicated region
    $region2: #{tpu_custom_call.1} parent=1 // pred_check
      _
    $region3: #{tpu_custom_call.1} parent=1 // pred_check_branch
      %14 = sbr.rel (0) target = $region5
    $region4: #{tpu_custom_call.1} parent=1 // pred_region
      %s16 = ssub.s32 512, 512
      %17 = vsyncadd [#allocation4], %s16
      %s18 = sshll.u32 [#allocation3], 4
      %s19 = int_to_ptr.vmem [resolvable:$true] %s18
      %24 = dma.hbm_to_vmem [thread:$0]  %s0, 512, %s19, [#allocation4], 128, 128, 8
    $region5: #{tpu_custom_call.1} parent=1 // pred_fallthru
      _
    // Predicated region
    $region6: #{tpu_custom_call.1} parent=1 // pred_check
      _
    $region7: #{tpu_custom_call.1} parent=1 // pred_check_branch
      %26 = sbr.rel (0) target = $region9
    $region8: #{tpu_custom_call.1} parent=1 // pred_region
      %s28 = ssub.s32 2048, 2048
      %29 = vsyncadd [#allocation7], %s28
      %s30 = sshll.u32 [#allocation6], 4
      %s31 = int_to_ptr.vmem [resolvable:$true] %s30
      %36 = dma.hbm_to_vmem [thread:$0]  %s1, 2048, %s31, [#allocation7], 128, 128, 8
    $region9: #{tpu_custom_call.1} parent=1 // pred_fallthru
      _
    // Predicated region
    $region10: #{tpu_custom_call.1} parent=1 // pred_check
      _
    $region11: #{tpu_custom_call.1} parent=1 // pred_check_branch
      %38 = sbr.rel (0) target = $region13
    $region12: #{tpu_custom_call.1} parent=1 // pred_region
      _
    $region13: #{tpu_custom_call.1} parent=1 // pred_fallthru
      _
    // Predicated region
    $region14: #{tpu_custom_call.1} parent=1 // pred_check
      _
    $region15: #{tpu_custom_call.1} parent=1 // pred_check_branch
      %40 = sbr.rel (0) target = $region17
    $region16: #{tpu_custom_call.1} parent=1 // pred_region
      %s42 = ssub.s32 2048, 2048
      %43 = vsyncadd [#allocation7], %s42
      %s44 = sshll.u32 [#allocation8], 4
      %s45 = int_to_ptr.vmem [resolvable:$true] %s44
      %50 = dma.hbm_to_vmem [thread:$0]  %s3, 2048, %s45, [#allocation7], 128, 128, 8
    $region17: #{tpu_custom_call.1} parent=1 // pred_fallthru
      _
    // Predicated region
    $region18: #{tpu_custom_call.1} parent=1 // pred_check
      _
    $region19: #{tpu_custom_call.1} parent=1 // pred_check_branch
      %52 = sbr.rel (0) target = $region21
    $region20: #{tpu_custom_call.1} parent=1 // pred_region
      _
    $region21: #{tpu_custom_call.1} parent=1 // pred_fallthru
      _
    // Predicated region
    $region22: #{tpu_custom_call.1} parent=1 // pred_check
      _
    $region23: #{tpu_custom_call.1} parent=1 // pred_check_branch
      %54 = sbr.rel (0) target = $region25
    $region24: #{tpu_custom_call.1} parent=1 // pred_region
      %55 = dma.done [#allocation4], 512
    $region25: #{tpu_custom_call.1} parent=1 // pred_fallthru
      _
    // Predicated region
    $region26: #{tpu_custom_call.1} parent=1 // pred_check
      _
    $region27: #{tpu_custom_call.1} parent=1 // pred_check_branch
      %57 = sbr.rel (0) target = $region29
    $region28: #{tpu_custom_call.1} parent=1 // pred_region
      %58 = dma.done [#allocation7], 2048
    $region29: #{tpu_custom_call.1} parent=1 // pred_fallthru
      _
    // Predicated region
    $region30: #{tpu_custom_call.1} parent=1 // pred_check
      _
    $region31: #{tpu_custom_call.1} parent=1 // pred_check_branch
      %60 = sbr.rel (0) target = $region33
    $region32: #{tpu_custom_call.1} parent=1 // pred_region
      %61 = dma.done [#allocation7], 2048
    $region33: #{tpu_custom_call.1} parent=1 // pred_fallthru
      _
    %p62 = scmp.eq.s32.totalorder 0, 0
    // Predicated region
    $region34: #{tpu_custom_call.1} parent=1 // pred_check
      %p63 = pneg %p62
    $region35: #{tpu_custom_call.1} parent=1 // pred_check_branch
      %65 = sbr.rel (%p63) target = $region37
    $region36: #{tpu_custom_call.1} parent=1 // pred_region
      %66 = vst [vmem:[#allocation2] sm:$0xff] 0.0
      %67 = vst [vmem:[#allocation2 + $0x8] sm:$0xff] 0.0
      %68 = vst [vmem:[#allocation2 + $0x10] sm:$0xff] 0.0
      %69 = vst [vmem:[#allocation2 + $0x18] sm:$0xff] 0.0
    $region37: #{tpu_custom_call.1} parent=1 // pred_fallthru
      _
    %v70 = vld [vmem:[#allocation3] sm:$0xff]
    %v71 = vld [vmem:[#allocation3 + $0x8] sm:$0xff]
    %v72 = vld [vmem:[#allocation3 + $0x10] sm:$0xff]
    %v73 = vld [vmem:[#allocation3 + $0x18] sm:$0xff]
    %v74 = vld [vmem:[#allocation6] sm:$0xff]
    %v75 = vld [vmem:[#allocation6 + $0x8] sm:$0xff]
    %v76 = vld [vmem:[#allocation6 + $0x10] sm:$0xff]
    %v77 = vld [vmem:[#allocation6 + $0x18] sm:$0xff]
    %v78 = vld [vmem:[#allocation6 + $0x20] sm:$0xff]
    %v79 = vld [vmem:[#allocation6 + $0x28] sm:$0xff]
    %v80 = vld [vmem:[#allocation6 + $0x30] sm:$0xff]
    %v81 = vld [vmem:[#allocation6 + $0x38] sm:$0xff]
    %v82 = vld [vmem:[#allocation6 + $0x40] sm:$0xff]
    %v83 = vld [vmem:[#allocation6 + $0x48] sm:$0xff]
    %v84 = vld [vmem:[#allocation6 + $0x50] sm:$0xff]
    %v85 = vld [vmem:[#allocation6 + $0x58] sm:$0xff]
    %v86 = vld [vmem:[#allocation6 + $0x60] sm:$0xff]
    %v87 = vld [vmem:[#allocation6 + $0x68] sm:$0xff]
    %v88 = vld [vmem:[#allocation6 + $0x70] sm:$0xff]
    %v89 = vld [vmem:[#allocation6 + $0x78] sm:$0xff]
    %v90 = vld [vmem:[%s2] sm:$0x1]
    %v92 = vlaneseq
    %v93 = vshrl.u32 %v92, 7
    %v94 = vsub.s32 0, %v93
    %v95 = vrot.slane %v90, %v94
    %97 = vmatprep.subr.mxu0 0.0
    %98 = vmatpush1.msra.mxu0 %v89
    %99 = vmatprep.subr.mxu0 0.0
    %100 = vmatpush1.msra.mxu0 %v88
    %101 = vmatprep.subr.mxu0 0.0
    %102 = vmatpush1.msra.mxu0 %v87
    %103 = vmatprep.subr.mxu0 0.0
    %104 = vmatpush1.msra.mxu0 %v86
    %105 = vmatprep.subr.mxu0 0.0
    %106 = vmatpush1.msra.mxu0 %v85
    %107 = vmatprep.subr.mxu0 0.0
    %108 = vmatpush1.msra.mxu0 %v84
    %109 = vmatprep.subr.mxu0 0.0
    %110 = vmatpush1.msra.mxu0 %v83
    %111 = vmatprep.subr.mxu0 0.0
    %112 = vmatpush1.msra.mxu0 %v82
    %113 = vmatprep.subr.mxu0 0.0
    %114 = vmatpush1.msra.mxu0 %v81
    %115 = vmatprep.subr.mxu0 0.0
    %116 = vmatpush1.msra.mxu0 %v80
    %117 = vmatprep.subr.mxu0 0.0
    %118 = vmatpush1.msra.mxu0 %v79
    %119 = vmatprep.subr.mxu0 0.0
    %120 = vmatpush1.msra.mxu0 %v78
    %121 = vmatprep.subr.mxu0 0.0
    %122 = vmatpush1.msra.mxu0 %v77
    %123 = vmatprep.subr.mxu0 0.0
    %124 = vmatpush1.msra.mxu0 %v76
    %125 = vmatprep.subr.mxu0 0.0
    %126 = vmatpush1.msra.mxu0 %v75
    %127 = vmatprep.subr.mxu0 0.0
    %128 = vmatpush1.msra.mxu0 %v74
    %129 = vmatprep.subr.mxu0 0.0
    %130 = vmatpush2.msra.mxu0 0.0
    %131 = vmatprep.subr.mxu0 0.0
    %132 = vmatpush2.msra.mxu0 0.0
    %133 = vmatprep.subr.mxu0 0.0
    %134 = vmatpush2.msra.mxu0 0.0
    %135 = vmatprep.subr.mxu0 0.0
    %136 = vmatpush2.msra.mxu0 0.0
    %137 = vmatprep.subr.mxu0 0.0
    %138 = vmatpush2.msra.mxu0 0.0
    %139 = vmatprep.subr.mxu0 0.0
    %140 = vmatpush2.msra.mxu0 0.0
    %141 = vmatprep.subr.mxu0 0.0
    %142 = vmatpush2.msra.mxu0 0.0
    %143 = vmatprep.subr.mxu0 0.0
    %144 = vmatpush2.msra.mxu0 0.0
    %145 = vmatprep.subr.mxu0 0.0
    %146 = vmatpush2.msra.mxu0 0.0
    %147 = vmatprep.subr.mxu0 0.0
    %148 = vmatpush2.msra.mxu0 0.0
    %149 = vmatprep.subr.mxu0 0.0
    %150 = vmatpush2.msra.mxu0 0.0
    %151 = vmatprep.subr.mxu0 0.0
    %152 = vmatpush2.msra.mxu0 0.0
    %153 = vmatprep.subr.mxu0 0.0
    %154 = vmatpush2.msra.mxu0 0.0
    %155 = vmatprep.subr.mxu0 0.0
    %156 = vmatpush2.msra.mxu0 0.0
    %157 = vmatprep.subr.mxu0 0.0
    %158 = vmatpush2.msra.mxu0 0.0
    %159 = vmatprep.subr.mxu0 0.0
    %160 = vmatpush2.msra.mxu0 0.0
    %161 = vmatprep.mubr.f32.mxu0 0.0
    %162 = vmatmul.mubr.f32.gmra.mxu0 %v70
    %v163 = vpop.f32.mrf.mxu0
    %v164 = vadd.f32 %v95, %v163
    %v165 = vpop.f32.mrf.mxu0
    %166 = vmatprep.mubr.f32.mxu0 0.0
    %167 = vmatmul.mubr.f32.gmra.mxu0 %v71
    %v168 = vpop.f32.mrf.mxu0
    %v169 = vadd.f32 %v95, %v168
    %v170 = vpop.f32.mrf.mxu0
    %171 = vmatprep.mubr.f32.mxu0 0.0
    %172 = vmatmul.mubr.f32.gmra.mxu0 %v72
    %v173 = vpop.f32.mrf.mxu0
    %v174 = vadd.f32 %v95, %v173
    %v175 = vpop.f32.mrf.mxu0
    %176 = vmatprep.mubr.f32.mxu0 0.0
    %177 = vmatmul.mubr.f32.gmra.mxu0 %v73
    %v178 = vpop.f32.mrf.mxu0
    %v179 = vadd.f32 %v95, %v178
    %v180 = vpop.f32.mrf.mxu0
    %181 = vdwg.mxu0
    %v182 = vmul.f32 %v164, 0.5
    %v183 = vmul.f32 %v169, 0.5
    %v184 = vmul.f32 %v174, 0.5
    %v185 = vmul.f32 %v179, 0.5
    %v186 = vmul.f32 %v164, 0.70710677
    %v187 = vmul.f32 %v169, 0.70710677
    %v188 = vmul.f32 %v174, 0.70710677
    %v189 = vmul.f32 %v179, 0.70710677
    %v190 = verf.f32.pop %v186
    %v191 = verf.f32.pop %v187
    %v192 = verf.f32.pop %v188
    %v193 = verf.f32.pop %v189
    %v194 = vadd.f32 %v190, 1.0
    %v195 = vadd.f32 %v191, 1.0
    %v196 = vadd.f32 %v192, 1.0
    %v197 = vadd.f32 %v193, 1.0
    %v198 = vmul.f32 %v182, %v194
    %v199 = vmul.f32 %v183, %v195
    %v200 = vmul.f32 %v184, %v196
    %v201 = vmul.f32 %v185, %v197
    %v202 = vld [vmem:[#allocation2] sm:$0xff]
    %v203 = vld [vmem:[#allocation2 + $0x8] sm:$0xff]
    %v204 = vld [vmem:[#allocation2 + $0x10] sm:$0xff]
    %v205 = vld [vmem:[#allocation2 + $0x18] sm:$0xff]
    %v206 = vld [vmem:[#allocation8] sm:$0xff]
    %v207 = vld [vmem:[#allocation8 + $0x8] sm:$0xff]
    %v208 = vld [vmem:[#allocation8 + $0x10] sm:$0xff]
    %v209 = vld [vmem:[#allocation8 + $0x18] sm:$0xff]
    %v210 = vld [vmem:[#allocation8 + $0x20] sm:$0xff]
    %v211 = vld [vmem:[#allocation8 + $0x28] sm:$0xff]
    %v212 = vld [vmem:[#allocation8 + $0x30] sm:$0xff]
    %v213 = vld [vmem:[#allocation8 + $0x38] sm:$0xff]
    %v214 = vld [vmem:[#allocation8 + $0x40] sm:$0xff]
    %v215 = vld [vmem:[#allocation8 + $0x48] sm:$0xff]
    %v216 = vld [vmem:[#allocation8 + $0x50] sm:$0xff]
    %v217 = vld [vmem:[#allocation8 + $0x58] sm:$0xff]
    %v218 = vld [vmem:[#allocation8 + $0x60] sm:$0xff]
    %v219 = vld [vmem:[#allocation8 + $0x68] sm:$0xff]
    %v220 = vld [vmem:[#allocation8 + $0x70] sm:$0xff]
    %v221 = vld [vmem:[#allocation8 + $0x78] sm:$0xff]
    %222 = vmatprep.subr.mxu0 0.0
    %223 = vmatpush1.msra.mxu0 %v221
    %224 = vmatprep.subr.mxu0 0.0
    %225 = vmatpush1.msra.mxu0 %v220
    %226 = vmatprep.subr.mxu0 0.0
    %227 = vmatpush1.msra.mxu0 %v219
    %228 = vmatprep.subr.mxu0 0.0
    %229 = vmatpush1.msra.mxu0 %v218
    %230 = vmatprep.subr.mxu0 0.0
    %231 = vmatpush1.msra.mxu0 %v217
    %232 = vmatprep.subr.mxu0 0.0
    %233 = vmatpush1.msra.mxu0 %v216
    %234 = vmatprep.subr.mxu0 0.0
    %235 = vmatpush1.msra.mxu0 %v215
    %236 = vmatprep.subr.mxu0 0.0
    %237 = vmatpush1.msra.mxu0 %v214
    %238 = vmatprep.subr.mxu0 0.0
    %239 = vmatpush1.msra.mxu0 %v213
    %240 = vmatprep.subr.mxu0 0.0
    %241 = vmatpush1.msra.mxu0 %v212
    %242 = vmatprep.subr.mxu0 0.0
    %243 = vmatpush1.msra.mxu0 %v211
    %244 = vmatprep.subr.mxu0 0.0
    %245 = vmatpush1.msra.mxu0 %v210
    %246 = vmatprep.subr.mxu0 0.0
    %247 = vmatpush1.msra.mxu0 %v209
    %248 = vmatprep.subr.mxu0 0.0
    %249 = vmatpush1.msra.mxu0 %v208
    %250 = vmatprep.subr.mxu0 0.0
    %251 = vmatpush1.msra.mxu0 %v207
    %252 = vmatprep.subr.mxu0 0.0
    %253 = vmatpush1.msra.mxu0 %v206
    %254 = vmatprep.subr.mxu0 0.0
    %255 = vmatpush2.msra.mxu0 0.0
    %256 = vmatprep.subr.mxu0 0.0
    %257 = vmatpush2.msra.mxu0 0.0
    %258 = vmatprep.subr.mxu0 0.0
    %259 = vmatpush2.msra.mxu0 0.0
    %260 = vmatprep.subr.mxu0 0.0
    %261 = vmatpush2.msra.mxu0 0.0
    %262 = vmatprep.subr.mxu0 0.0
    %263 = vmatpush2.msra.mxu0 0.0
    %264 = vmatprep.subr.mxu0 0.0
    %265 = vmatpush2.msra.mxu0 0.0
    %266 = vmatprep.subr.mxu0 0.0
    %267 = vmatpush2.msra.mxu0 0.0
    %268 = vmatprep.subr.mxu0 0.0
    %269 = vmatpush2.msra.mxu0 0.0
    %270 = vmatprep.subr.mxu0 0.0
    %271 = vmatpush2.msra.mxu0 0.0
    %272 = vmatprep.subr.mxu0 0.0
    %273 = vmatpush2.msra.mxu0 0.0
    %274 = vmatprep.subr.mxu0 0.0
    %275 = vmatpush2.msra.mxu0 0.0
    %276 = vmatprep.subr.mxu0 0.0
    %277 = vmatpush2.msra.mxu0 0.0
    %278 = vmatprep.subr.mxu0 0.0
    %279 = vmatpush2.msra.mxu0 0.0
    %280 = vmatprep.subr.mxu0 0.0
    %281 = vmatpush2.msra.mxu0 0.0
    %282 = vmatprep.subr.mxu0 0.0
    %283 = vmatpush2.msra.mxu0 0.0
    %284 = vmatprep.subr.mxu0 0.0
    %285 = vmatpush2.msra.mxu0 0.0
    %286 = vmatprep.mubr.f32.mxu0 0.0
    %287 = vmatmul.mubr.f32.gmra.mxu0 %v198
    %v288 = vpop.f32.mrf.mxu0
    %v289 = vadd.f32 0.0, %v288
    %v290 = vpop.f32.mrf.mxu0
    %291 = vmatprep.mubr.f32.mxu0 0.0
    %292 = vmatmul.mubr.f32.gmra.mxu0 %v199
    %v293 = vpop.f32.mrf.mxu0
    %v294 = vadd.f32 0.0, %v293
    %v295 = vpop.f32.mrf.mxu0
    %296 = vmatprep.mubr.f32.mxu0 0.0
    %297 = vmatmul.mubr.f32.gmra.mxu0 %v200
    %v298 = vpop.f32.mrf.mxu0
    %v299 = vadd.f32 0.0, %v298
    %v300 = vpop.f32.mrf.mxu0
    %301 = vmatprep.mubr.f32.mxu0 0.0
    %302 = vmatmul.mubr.f32.gmra.mxu0 %v201
    %v303 = vpop.f32.mrf.mxu0
    %v304 = vadd.f32 0.0, %v303
    %v305 = vpop.f32.mrf.mxu0
    %306 = vdwg.mxu0
    %v307 = vadd.f32 %v202, %v289
    %v308 = vadd.f32 %v203, %v294
    %v309 = vadd.f32 %v204, %v299
    %v310 = vadd.f32 %v205, %v304
    %311 = vst [vmem:[#allocation2] sm:$0xff] %v307
    %312 = vst [vmem:[#allocation2 + $0x8] sm:$0xff] %v308
    %313 = vst [vmem:[#allocation2 + $0x10] sm:$0xff] %v309
    %314 = vst [vmem:[#allocation2 + $0x18] sm:$0xff] %v310
    // Predicated region
    $region38: #{tpu_custom_call.1} parent=1 // pred_check
      %p315 = pneg %p62
    $region39: #{tpu_custom_call.1} parent=1 // pred_check_branch
      %317 = sbr.rel (%p315) target = $region41
    $region40: #{tpu_custom_call.1} parent=1 // pred_region
      %v318 = vld [vmem:[#allocation2] sm:$0xff]
      %v319 = vld [vmem:[#allocation2 + $0x8] sm:$0xff]
      %v320 = vld [vmem:[#allocation2 + $0x10] sm:$0xff]
      %v321 = vld [vmem:[#allocation2 + $0x18] sm:$0xff]
      %v322 = vld [vmem:[%s4] sm:$0x1]
      %v324 = vlaneseq
      %v325 = vshrl.u32 %v324, 7
      %v326 = vsub.s32 0, %v325
      %v327 = vrot.slane %v322, %v326
      %v329 = vadd.f32 %v318, %v327
      %v330 = vadd.f32 %v319, %v327
      %v331 = vadd.f32 %v320, %v327
      %v332 = vadd.f32 %v321, %v327
      %333 = vst [vmem:[#allocation9] sm:$0xff] %v329
      %334 = vst [vmem:[#allocation9 + $0x8] sm:$0xff] %v330
      %335 = vst [vmem:[#allocation9 + $0x10] sm:$0xff] %v331
      %336 = vst [vmem:[#allocation9 + $0x18] sm:$0xff] %v332
    $region41: #{tpu_custom_call.1} parent=1 // pred_fallthru
      _
    // Predicated region
    $region42: #{tpu_custom_call.1} parent=1 // pred_check
      _
    $region43: #{tpu_custom_call.1} parent=1 // pred_check_branch
      %338 = sbr.rel (0) target = $region45
    $region44: #{tpu_custom_call.1} parent=1 // pred_region
      %s340 = ssub.s32 512, 512
      %341 = vsyncadd [#allocation5], %s340
      %s342 = sshll.u32 [#allocation9], 4
      %s343 = int_to_ptr.vmem [resolvable:$true] %s342
      %348 = dma.vmem_to_hbm [thread:$0]  %s343, 512, %s5, [#allocation5], 128, 128, 8
    $region45: #{tpu_custom_call.1} parent=1 // pred_fallthru
      _
    // Predicated region
    $region46: #{tpu_custom_call.1} parent=1 // pred_check
      _
    $region47: #{tpu_custom_call.1} parent=1 // pred_check_branch
      %350 = sbr.rel (0) target = $region49
    $region48: #{tpu_custom_call.1} parent=1 // pred_region
      %351 = dma.done [#allocation5], 512
    $region49: #{tpu_custom_call.1} parent=1 // pred_fallthru
      _
    %352 = vsyncpa [#allocation4], 1
    %353 = vsyncpa [#allocation7], 1
    %354 = vsyncpa [#allocation5], 1

</llo_original>
